<compile_context>
chip_gen: v7x
topology: tpu7x:2x2x1
jax: 0.10.0
libtpu: 0.0.40
codegen_flags: <defaults>
</compile_context>

<pallas_src>
import jax
import jax.numpy as jnp
from jax.experimental import pallas as pl
from jax.experimental.pallas import tpu as pltpu


def _rep3_relu_kernel(x_ref, o_ref):
    """o[:, k*W:(k+1)*W] = relu(x) for k in {0,1,2}.  x: (rows, W), o: (rows, 3W)."""
    v = jnp.maximum(x_ref[...], 0)          # dtype-preserving ReLU on the VPU
    w = x_ref.shape[-1]
    # Three lane-contiguous stores at static offsets; unmasked vst when w % 128 == 0.
    for k in range(3):
        o_ref[:, k * w:(k + 1) * w] = v


def _rep3_relu_2d(x2d, *, target_tile_bytes=1 << 20):
    """ReLU + replicate x3 along the last axis of a 2D array via a row-gridded kernel."""
    rows, width = x2d.shape
    itemsize = jnp.dtype(x2d.dtype).itemsize

    # Pick a row block: a multiple of 8 that divides `rows`, capped so the input
    # tile is ~target_tile_bytes (live VMEM ~= 2 buffers x (1x in + 3x out) = 8x that).
    rb = rows
    if rows % 8 == 0:
        max_rows = max(8, target_tile_bytes // max(1, width * itemsize))
        cand = max(8, min(rows, (max_rows // 8) * 8))
        while cand > 8 and rows % cand != 0:
            cand -= 8
        if rows % cand == 0:
            rb = cand
    # TODO(synk): rows not divisible by 8 falls back to a single full-extent block;
    # for huge ragged row counts add a padded tail block instead.

    grid = (rows // rb,)
    return pl.pallas_call(
        _rep3_relu_kernel,
        out_shape=jax.ShapeDtypeStruct((rows, 3 * width), x2d.dtype),
        grid=grid,
        in_specs=[pl.BlockSpec((rb, width), lambda i: (i, 0))],
        out_specs=pl.BlockSpec((rb, 3 * width), lambda i: (i, 0)),
        compiler_params=pltpu.CompilerParams(
            dimension_semantics=("parallel",),   # megacore sharding on v7x, free elsewhere
        ),
    )(x2d)


@jax.jit
def cat_relu(x, y):
    B, C, D = x.shape
    By, Cy, Dy = y.shape

    # x-path: torch.cat([x, x, x], dim=1).relu()
    #   collapse (C, D) into the lane axis -> replicate along lanes -> contiguous reshape back
    ox2d = _rep3_relu_2d(x.reshape(B, C * D))          # (B, 3*C*D)
    out_x = ox2d.reshape(B, 3 * C, D)                  # free contiguous view

    # y-path: torch.cat([y, y, y], dim=-1).relu()
    #   collapse (B, C) into the row axis -> replicate along lanes -> contiguous reshape back
    oy2d = _rep3_relu_2d(y.reshape(By * Cy, Dy))       # (B*C, 3*D)
    out_y = oy2d.reshape(By, Cy, 3 * Dy)               # free contiguous view

    return out_x, out_y


if __name__ == "__main__":
    key = jax.random.PRNGKey(0)
    kx, ky = jax.random.split(key)
    # Shapes from the PyTorch script: x, y = randn(2, 3, 4)
    x = jax.random.normal(kx, (2, 3, 4), dtype=jnp.float32)
    y = jax.random.normal(ky, (2, 3, 4), dtype=jnp.float32)

    out_x, out_y = cat_relu(x, y)
    jax.block_until_ready((out_x, out_y))

    # Reference check (plain JAX mirror of the PyTorch forward).
    ref_x = jnp.maximum(jnp.concatenate([x, x, x], axis=1), 0.0)
    ref_y = jnp.maximum(jnp.concatenate([y, y, y], axis=-1), 0.0)
    assert out_x.shape == (2, 9, 4) and out_y.shape == (2, 3, 12)
    assert jnp.allclose(out_x, ref_x) and jnp.allclose(out_y, ref_y)

    print("KERNEL_OK")
</pallas_src>

<mosaic_0001>
module attributes {stable_mosaic.version = 11 : i64} {
  func.func @_rep3_relu_kernel(%arg0: i32, %arg1: memref<2x12xf32, #tpu.memory_space<vmem>>, %arg2: memref<2x36xf32, #tpu.memory_space<vmem>>) attributes {dimension_semantics = [#tpu.dimension_semantics<parallel>], iteration_bounds = array<i64: 1>, scalar_prefetch = 0 : i64, scratch_operands = 0 : i64, tpu.core_type = #tpu.core_type<tc>, window_params = [{transform_indices = @transform_0, window_bounds = array<i64: 2, 12>}, {transform_indices = @transform_1, window_bounds = array<i64: 2, 36>}]} {
    %c0 = arith.constant 0 : index
    %c0_0 = arith.constant 0 : index
    %0 = vector.load %arg1[%c0, %c0_0] : memref<2x12xf32, #tpu.memory_space<vmem>>, vector<2x12xf32>
    %cst = arith.constant 0.000000e+00 : f32
    %1 = vector.broadcast %cst : f32 to vector<2x12xf32>
    %2 = arith.maximumf %0, %1 : vector<2x12xf32>
    %c0_1 = arith.constant 0 : index
    %c0_2 = arith.constant 0 : index
    %3 = vector.load %arg2[%c0_1, %c0_2] : memref<2x36xf32, #tpu.memory_space<vmem>>, vector<2x12xf32>
    tpu.vector_store %arg2[%c0_1, %c0_2], %2 {strides = array<i32>} : memref<2x36xf32, #tpu.memory_space<vmem>>, vector<2x12xf32>,
    %c0_3 = arith.constant 0 : index
    %c12 = arith.constant 12 : index
    %4 = vector.load %arg2[%c0_3, %c12] : memref<2x36xf32, #tpu.memory_space<vmem>>, vector<2x12xf32>
    tpu.vector_store %arg2[%c0_3, %c12], %2 {strides = array<i32>} : memref<2x36xf32, #tpu.memory_space<vmem>>, vector<2x12xf32>,
    %c0_4 = arith.constant 0 : index
    %c24 = arith.constant 24 : index
    %5 = vector.load %arg2[%c0_4, %c24] : memref<2x36xf32, #tpu.memory_space<vmem>>, vector<2x12xf32>
    tpu.vector_store %arg2[%c0_4, %c24], %2 {strides = array<i32>} : memref<2x36xf32, #tpu.memory_space<vmem>>, vector<2x12xf32>,
    return
  }
  func.func @transform_0(%arg0: i32) -> (i32, i32) {
    %c0_i32 = arith.constant 0 : i32
    %c0_i32_0 = arith.constant 0 : i32
    return %arg0, %c0_i32 : i32, i32
  }
  func.func @transform_1(%arg0: i32) -> (i32, i32) {
    %c0_i32 = arith.constant 0 : i32
    %c0_i32_0 = arith.constant 0 : i32
    return %arg0, %c0_i32 : i32, i32
  }
}

module attributes {stable_mosaic.version = 11 : i64} {
  func.func @_rep3_relu_kernel(%arg0: i32, %arg1: memref<6x4xf32, #tpu.memory_space<vmem>>, %arg2: memref<6x12xf32, #tpu.memory_space<vmem>>) attributes {dimension_semantics = [#tpu.dimension_semantics<parallel>], iteration_bounds = array<i64: 1>, scalar_prefetch = 0 : i64, scratch_operands = 0 : i64, tpu.core_type = #tpu.core_type<tc>, window_params = [{transform_indices = @transform_0, window_bounds = array<i64: 6, 4>}, {transform_indices = @transform_1, window_bounds = array<i64: 6, 12>}]} {
    %c0 = arith.constant 0 : index
    %c0_0 = arith.constant 0 : index
    %0 = vector.load %arg1[%c0, %c0_0] : memref<6x4xf32, #tpu.memory_space<vmem>>, vector<6x4xf32>
    %cst = arith.constant 0.000000e+00 : f32
    %1 = vector.broadcast %cst : f32 to vector<6x4xf32>
    %2 = arith.maximumf %0, %1 : vector<6x4xf32>
    %c0_1 = arith.constant 0 : index
    %c0_2 = arith.constant 0 : index
    %3 = vector.load %arg2[%c0_1, %c0_2] : memref<6x12xf32, #tpu.memory_space<vmem>>, vector<6x4xf32>
    tpu.vector_store %arg2[%c0_1, %c0_2], %2 {strides = array<i32>} : memref<6x12xf32, #tpu.memory_space<vmem>>, vector<6x4xf32>,
    %c0_3 = arith.constant 0 : index
    %c4 = arith.constant 4 : index
    %4 = vector.load %arg2[%c0_3, %c4] : memref<6x12xf32, #tpu.memory_space<vmem>>, vector<6x4xf32>
    tpu.vector_store %arg2[%c0_3, %c4], %2 {strides = array<i32>} : memref<6x12xf32, #tpu.memory_space<vmem>>, vector<6x4xf32>,
    %c0_4 = arith.constant 0 : index
    %c8 = arith.constant 8 : index
    %5 = vector.load %arg2[%c0_4, %c8] : memref<6x12xf32, #tpu.memory_space<vmem>>, vector<6x4xf32>
    tpu.vector_store %arg2[%c0_4, %c8], %2 {strides = array<i32>} : memref<6x12xf32, #tpu.memory_space<vmem>>, vector<6x4xf32>,
    return
  }
  func.func @transform_0(%arg0: i32) -> (i32, i32) {
    %c0_i32 = arith.constant 0 : i32
    %c0_i32_0 = arith.constant 0 : i32
    return %arg0, %c0_i32 : i32, i32
  }
  func.func @transform_1(%arg0: i32) -> (i32, i32) {
    %c0_i32 = arith.constant 0 : i32
    %c0_i32_0 = arith.constant 0 : i32
    return %arg0, %c0_i32 : i32, i32
  }
}

</mosaic_0001>

<llo_original>
// kernel: cat_relu.2
$region0: #{cat_relu.2}
  #allocation0 [shape = 'u32[]', space=smem, size = 0x4, offset = 0x4, fixed_abs, tag = 'smem constant byte address 0x4 - core index']
  #allocation1 [shape = 'u32[144,128]{1,0:T(1,128)}', space=vmem, size = 0x12000, scoped, tag = 'internal scratch']
  %s0 = inlined_call_operand.vmem [shape: f32[2,12], index: 0, kind: input, shape index: {}]
  %s1 = inlined_call_operand.vmem [shape: f32[2,36], index: 1, kind: output, shape index: {}]
  %s2 = sld [smem:[#allocation0]]
  $region14: #{cat_relu.2} parent=0
    _
  %s4 = ssub.s32 1, %s2
  %s5 = scalar_select 0, %s4, %s2
  // Predicated region
  $region2: #{cat_relu.2} parent=0 // pred_check
    _
  $region3: #{cat_relu.2} parent=0 // pred_check_branch
    %7 = sbr.rel (0) target = $region5
  $region4: #{cat_relu.2} parent=0 // pred_region
    _
  $region5: #{cat_relu.2} parent=0 // pred_fallthru
    _
  %v8 = vld [vmem:[%s0] sm:$0x3]
  %v9 = vmax.f32 %v8, 0.0
  %vm10 = vcmask 91136
  %11 = vst.msk [vmem:[%s1] sm:$0x3] %vm10, %v9
  %13 = vrot.lane.b32.xlu0 %v9, 12
  %v14 = vpop.permute.xlu0 %13
  %vm16 = vcmask 189536
  %17 = vst.msk [vmem:[%s1] sm:$0x3] %vm16, %v14
  %18 = vrot.lane.b32.xlu0 %v9, 24
  %v19 = vpop.permute.xlu0 %18
  %vm21 = vcmask 287936
  %22 = vst.msk [vmem:[%s1] sm:$0x3] %vm21, %v19
  // Predicated region
  $region6: #{cat_relu.2} parent=0 // pred_check
    _
  $region7: #{cat_relu.2} parent=0 // pred_check_branch
    %24 = sbr.rel (0) target = $region9
  $region8: #{cat_relu.2} parent=0 // pred_region
    _
  $region9: #{cat_relu.2} parent=0 // pred_fallthru
    _
  // Predicated region
  $region10: #{cat_relu.2} parent=0 // pred_check
    _
  $region11: #{cat_relu.2} parent=0 // pred_check_branch
    %26 = sbr.rel (0) target = $region13
  $region12: #{cat_relu.2} parent=0 // pred_region
    _
  $region13: #{cat_relu.2} parent=0 // pred_fallthru
    _

// kernel: cat_relu.3
$region0: #{cat_relu.3}
  #allocation0 [shape = 'u32[]', space=smem, size = 0x4, offset = 0x4, fixed_abs, tag = 'smem constant byte address 0x4 - core index']
  #allocation1 [shape = 'u32[144,128]{1,0:T(1,128)}', space=vmem, size = 0x12000, scoped, tag = 'internal scratch']
  %s0 = inlined_call_operand.vmem [shape: f32[6,4], index: 0, kind: input, shape index: {}]
  %s1 = inlined_call_operand.vmem [shape: f32[6,12], index: 1, kind: output, shape index: {}]
  %s2 = sld [smem:[#allocation0]]
  $region14: #{cat_relu.3} parent=0
    _
  %s4 = ssub.s32 1, %s2
  %s5 = scalar_select 0, %s4, %s2
  // Predicated region
  $region2: #{cat_relu.3} parent=0 // pred_check
    _
  $region3: #{cat_relu.3} parent=0 // pred_check_branch
    %7 = sbr.rel (0) target = $region5
  $region4: #{cat_relu.3} parent=0 // pred_region
    _
  $region5: #{cat_relu.3} parent=0 // pred_fallthru
    _
  %v8 = vld [vmem:[%s0] sm:$0x3f]
  %v9 = vmax.f32 %v8, 0.0
  %vm10 = vcmask 29696
  %11 = vst.msk [vmem:[%s1] sm:$0x3f] %vm10, %v9
  %13 = vrot.lane.b32.xlu0 %v9, 4
  %v14 = vpop.permute.xlu0 %13
  %vm16 = vcmask 62496
  %17 = vst.msk [vmem:[%s1] sm:$0x3f] %vm16, %v14
  %18 = vrot.lane.b32.xlu0 %v9, 8
  %v19 = vpop.permute.xlu0 %18
  %vm21 = vcmask 95296
  %22 = vst.msk [vmem:[%s1] sm:$0x3f] %vm21, %v19
  // Predicated region
  $region6: #{cat_relu.3} parent=0 // pred_check
    _
  $region7: #{cat_relu.3} parent=0 // pred_check_branch
    %24 = sbr.rel (0) target = $region9
  $region8: #{cat_relu.3} parent=0 // pred_region
    _
  $region9: #{cat_relu.3} parent=0 // pred_fallthru
    _
  // Predicated region
  $region10: #{cat_relu.3} parent=0 // pred_check
    _
  $region11: #{cat_relu.3} parent=0 // pred_check_branch
    %26 = sbr.rel (0) target = $region13
  $region12: #{cat_relu.3} parent=0 // pred_region
    _
  $region13: #{cat_relu.3} parent=0 // pred_fallthru
    _

</llo_original>
